<compile_context>
chip_gen: v5e
topology: v5e:2x2
jax: 0.10.0
libtpu: 0.0.40
codegen_flags: <defaults>
</compile_context>

<pallas_src>
import functools

import jax
import jax.numpy as jnp
from jax.experimental import pallas as pl
from jax.experimental.pallas import tpu as pltpu

_LANES = 128


def _pick_row_tile(Hout, Wout, target_rows=256):
    """Largest row tile TH with: TH | Hout, (TH*Wout) sublane aligned,
    TH*Wout ~<= target_rows, and >=2 spatial grid steps when possible."""
    upper = Hout // 2 if Hout >= 2 else Hout
    cap = max(1, min(upper, max(1, target_rows // max(Wout, 1))))
    for th in range(cap, 0, -1):
        if Hout % th == 0 and (th * Wout) % 8 == 0:
            return th
    return Hout  # single full-height tile; block == full dim is always legal


def _snpconv_kernel(x_ref, w_ref, b_ref, o_ref, *, KH, KW, dilation, TH, Wout,
                    relu):
    """One (batch element, output-row tile) per grid step.

    x_ref: (Hp, Wp, Cin)        zero-padded input image (resident per batch)
    w_ref: (KH*KW*Cin, Cout_p)  BN-scale-folded, lane-padded weights
    b_ref: (1, Cout_p)          folded BN bias (zeros where padded / bn off)
    o_ref: (TH*Wout, Cout_p)    lane-dense output row tile
    """
    t = pl.program_id(1)
    halo = (KH - 1) * dilation

    # Load only the rows this tile needs (TH output rows + conv halo).
    row0 = pl.multiple_of(t * TH, TH)
    x_tile = x_ref[pl.ds(row0, TH + halo), :, :]
    if relu:
        # SNPConv applies relu *before* the conv; relu(0)=0, so the zero
        # spatial padding done in the wrapper commutes with it.
        x_tile = jnp.maximum(x_tile, jnp.zeros((), x_tile.dtype))

    # im2col: (TH, Wout, KH*KW*Cin) with (kh, kw, ci) tap-major ordering to
    # match the wrapper's weight reshape.  Built once, then ONE matmul with
    # full contraction depth K = KH*KW*Cin instead of KH*KW matmuls with K=Cin.
    cols = []
    for kh in range(KH):
        rows = x_tile[kh * dilation:kh * dilation + TH, :, :]
        for kw in range(KW):
            cols.append(rows[:, kw * dilation:kw * dilation + Wout, :])
    patch = jnp.concatenate(cols, axis=-1)
    patch = patch.reshape(TH * Wout, patch.shape[-1]).astype(w_ref.dtype)

    acc = jnp.dot(patch, w_ref[...], preferred_element_type=jnp.float32)

    # Epilogue: BN scale is already folded into the weights -> single bias add
    # and a single full-width (lane-dense) store.
    o_ref[...] = (acc + b_ref[...]).astype(o_ref.dtype)


def fold_snpconv_params(weight_oihw, bn_gamma=None, bn_beta=None, bn_mean=None,
                        bn_var=None, *, eps=1e-5, compute_dtype=jnp.float32):
    """One-time (model-init) weight layout change + BatchNorm folding.

    Returns (w2d, bias_p, meta):
      w2d    : (KH*KW*Cin, Cout_p)  BN-scale-folded weights in the MXU dtype
      bias_p : (1, Cout_p) float32  folded BN bias (zeros if bn disabled)
      meta   : (Cout, Cin, KH, KW)
    """
    Cout, Cin, KH, KW = weight_oihw.shape
    w = jnp.transpose(weight_oihw, (2, 3, 1, 0)).astype(jnp.float32)  # HWIO
    if bn_gamma is not None:
        scale = bn_gamma.astype(jnp.float32) * jax.lax.rsqrt(
            bn_var.astype(jnp.float32) + eps)
        bias = bn_beta.astype(jnp.float32) - bn_mean.astype(jnp.float32) * scale
        w = w * scale                                   # fold BN scale
    else:
        bias = jnp.zeros((Cout,), jnp.float32)

    Cout_p = pl.cdiv(Cout, _LANES) * _LANES             # lane-dense channels
    w2d = w.reshape(KH * KW * Cin, Cout).astype(compute_dtype)
    w2d = jnp.pad(w2d, ((0, 0), (0, Cout_p - Cout)))
    bias_p = jnp.pad(bias, (0, Cout_p - Cout)).reshape(1, Cout_p)
    return w2d, bias_p, (Cout, Cin, KH, KW)


def snp_conv_nhwc(x_nhwc, w2d, bias_p, meta, *, padding=0, dilation=1,
                  relu=True, out_dtype=None):
    """[relu] -> conv2d (stride=1, groups=1) -> [folded BN] on NHWC input."""
    Cout, Cin, KH, KW = meta
    N, Hin, Win, Cin_x = x_nhwc.shape
    assert Cin_x == Cin, "channel mismatch / grouped conv not supported"
    Hp, Wp = Hin + 2 * padding, Win + 2 * padding
    Hout = Hp - dilation * (KH - 1)
    Wout = Wp - dilation * (KW - 1)
    assert Hout >= 1 and Wout >= 1, "degenerate output shape"
    Cout_p = w2d.shape[1]
    out_dtype = x_nhwc.dtype if out_dtype is None else out_dtype

    TH = _pick_row_tile(Hout, Wout)
    n_row_tiles = Hout // TH

    # --- VMEM budget guard (whole padded image is resident per batch elem) ---
    in_bytes = Hp * Wp * Cin * jnp.dtype(x_nhwc.dtype).itemsize
    w_bytes = w2d.size * jnp.dtype(w2d.dtype).itemsize + bias_p.size * 4
    out_bytes = TH * Wout * Cout_p * jnp.dtype(out_dtype).itemsize
    scratch_bytes = TH * Wout * (KH * KW * Cin * jnp.dtype(w2d.dtype).itemsize
                                 + Cout_p * 4)
    est = 2 * (in_bytes + w_bytes + out_bytes) + scratch_bytes
    if est > 40 * 2 ** 20:
        # TODO(synk): switch to halo'd row tiling of the input for big images.
        raise ValueError(
            f"input too large for whole-image-resident kernel "
            f"(~{est >> 20} MiB VMEM needed); spatial halo tiling required")
    vmem_limit = int(min(48 * 2 ** 20, max(16 * 2 ** 20, 2 * est)))

    x_pad = jnp.pad(
        x_nhwc, ((0, 0), (padding, padding), (padding, padding), (0, 0)))

    kernel = functools.partial(_snpconv_kernel, KH=KH, KW=KW,
                               dilation=dilation, TH=TH, Wout=Wout, relu=relu)

    out = pl.pallas_call(
        kernel,
        out_shape=jax.ShapeDtypeStruct((N, Hout * Wout, Cout_p), out_dtype),
        grid_spec=pltpu.PrefetchScalarGridSpec(
            num_scalar_prefetch=0,
            grid=(N, n_row_tiles),
            in_specs=[
                # Whole padded image; index_map constant along the row-tile
                # axis so it's DMAed once per batch element and stays resident.
                pl.BlockSpec((None, Hp, Wp, Cin), lambda n, t: (n, 0, 0, 0)),
                # Grid-invariant weights / bias: resident, never re-DMAed.
                pl.BlockSpec((KH * KW * Cin, Cout_p), lambda n, t: (0, 0)),
                pl.BlockSpec((1, Cout_p), lambda n, t: (0, 0)),
            ],
            out_specs=pl.BlockSpec((None, TH * Wout, Cout_p),
                                   lambda n, t: (n, t, 0)),
        ),
        compiler_params=pltpu.CompilerParams(
            dimension_semantics=("parallel", "parallel"),
            vmem_limit_bytes=vmem_limit),
    )(x_pad, w2d, bias_p)

    # Undo lane padding; keep NHWC so downstream blocks avoid extra transposes.
    return out.reshape(N, Hout, Wout, Cout_p)[..., :Cout]


def snp_conv(x_nchw, weight_oihw, bn_gamma=None, bn_beta=None, bn_mean=None,
             bn_var=None, *, stride=1, padding=0, dilation=1, relu=True,
             eps=1e-5, compute_dtype=None, out_dtype=None):
    """PyTorch-layout convenience wrapper: [relu] -> conv2d -> [BN eval].

    NCHW input / OIHW weight; stride=1, groups=1 only.  In a real model call
    fold_snpconv_params once at init and use snp_conv_nhwc end-to-end instead.
    """
    assert stride == 1, "kernel implements stride=1 only"
    if compute_dtype is None:
        compute_dtype = x_nchw.dtype      # never silently widen bf16 -> f32
    w2d, bias_p, meta = fold_snpconv_params(
        weight_oihw, bn_gamma, bn_beta, bn_mean, bn_var, eps=eps,
        compute_dtype=compute_dtype)
    x_nhwc = jnp.transpose(x_nchw, (0, 2, 3, 1))
    out = snp_conv_nhwc(x_nhwc, w2d, bias_p, meta, padding=padding,
                        dilation=dilation, relu=relu, out_dtype=out_dtype)
    return jnp.transpose(out, (0, 3, 1, 2))


def spatial_gate(x_nchw, weight_oihw):
    """ASSR SpatialGate: ChannelPool -> 7x7 conv (no relu/bn) -> sigmoid."""
    # TODO(synk): ChannelPool + sigmoid are plain JAX; could be fused into the
    # conv kernel's prologue/epilogue.
    pooled = jnp.concatenate(
        [jnp.max(x_nchw, axis=1, keepdims=True),
         jnp.mean(x_nchw, axis=1, keepdims=True)], axis=1)
    k = weight_oihw.shape[2]
    y = snp_conv(pooled, weight_oihw, padding=(k - 1) // 2, relu=False)
    return jax.nn.sigmoid(y)


# ----------------------------- references -----------------------------------
def _snpconv_ref(x, w, gamma=None, beta=None, mean=None, var=None, *,
                 padding=0, dilation=1, relu=True, eps=1e-5):
    x = jnp.maximum(x, 0.0) if relu else x
    y = jax.lax.conv_general_dilated(
        x, w, window_strides=(1, 1),
        padding=[(padding, padding), (padding, padding)],
        rhs_dilation=(dilation, dilation),
        dimension_numbers=("NCHW", "OIHW", "NCHW"))
    if gamma is not None:
        scale = gamma / jnp.sqrt(var + eps)
        y = y * scale[None, :, None, None] + (
            beta - mean * scale)[None, :, None, None]
    return y


def _spatial_gate_ref(x, w):
    pooled = jnp.concatenate(
        [jnp.max(x, axis=1, keepdims=True),
         jnp.mean(x, axis=1, keepdims=True)], axis=1)
    k = w.shape[2]
    y = _snpconv_ref(pooled, w, padding=(k - 1) // 2, relu=False)
    return jax.nn.sigmoid(y)


def _check(name, out, ref, tol=2e-4):
    assert out.shape == ref.shape, f"{name}: shape mismatch {out.shape} vs {ref.shape}"
    err = float(jnp.max(jnp.abs(out - ref)))
    assert err < tol, f"{name}: max abs err {err} vs reference (tol {tol})"


if __name__ == "__main__":
    key = jax.random.PRNGKey(0)
    ks = jax.random.split(key, 16)

    N, Cin, H, W = 2, 4, 16, 16
    Cout, KH, KW = 8, 3, 3
    x = jax.random.normal(ks[0], (N, Cin, H, W), jnp.float32)
    w = jax.random.normal(ks[1], (Cout, Cin, KH, KW), jnp.float32) * 0.1
    gamma = 1.0 + 0.1 * jax.random.normal(ks[2], (Cout,), jnp.float32)
    beta = 0.1 * jax.random.normal(ks[3], (Cout,), jnp.float32)
    mean = 0.1 * jax.random.normal(ks[4], (Cout,), jnp.float32)
    var = jnp.abs(jax.random.normal(ks[5], (Cout,), jnp.float32)) + 0.5

    # 1. SNPConv-style 3x3 conv with relu + BN (ASSR last_conv / SNPConv).
    out1 = jax.block_until_ready(
        snp_conv(x, w, gamma, beta, mean, var, padding=1, relu=True))
    _check("3x3 relu+bn", out1,
           _snpconv_ref(x, w, gamma, beta, mean, var, padding=1, relu=True))

    # 2. ASPP-branch style dilated 3x3 conv (no relu, no BN).
    w2 = jax.random.normal(ks[6], (Cout, Cin, 3, 3), jnp.float32) * 0.1
    out2 = jax.block_until_ready(
        snp_conv(x, w2, padding=2, dilation=2, relu=False))
    _check("3x3 dilated", out2,
           _snpconv_ref(x, w2, padding=2, dilation=2, relu=False))

    # 3. reduceN-style 1x1 conv with relu + BN.
    Cin3, Cout3 = 8, 16
    x3 = jax.random.normal(ks[7], (N, Cin3, H, W), jnp.float32)
    w3 = jax.random.normal(ks[8], (Cout3, Cin3, 1, 1), jnp.float32) * 0.1
    g3 = 1.0 + 0.1 * jax.random.normal(ks[9], (Cout3,), jnp.float32)
    b3 = 0.1 * jax.random.normal(ks[10], (Cout3,), jnp.float32)
    m3 = 0.1 * jax.random.normal(ks[11], (Cout3,), jnp.float32)
    v3 = jnp.abs(jax.random.normal(ks[12], (Cout3,), jnp.float32)) + 0.5
    out3 = jax.block_until_ready(
        snp_conv(x3, w3, g3, b3, m3, v3, padding=0, relu=True))
    _check("1x1 relu+bn", out3,
           _snpconv_ref(x3, w3, g3, b3, m3, v3, padding=0, relu=True))

    # 4. SpatialGate: ChannelPool -> 7x7 conv -> sigmoid (conv via the kernel).
    w7 = jax.random.normal(ks[13], (1, 2, 7, 7), jnp.float32) * 0.1
    out4 = jax.block_until_ready(spatial_gate(x, w7))
    _check("spatial gate 7x7", out4, _spatial_gate_ref(x, w7))

    # 5. bf16 activation path (bf16 MXU operands, f32 accumulation).
    xb = x.astype(jnp.bfloat16)
    out5 = jax.block_until_ready(
        snp_conv(xb, w, gamma, beta, mean, var, padding=1, relu=True))
    _check("3x3 relu+bn bf16", out5.astype(jnp.float32),
           _snpconv_ref(xb.astype(jnp.float32), w, gamma, beta, mean, var,
                        padding=1, relu=True), tol=6e-2)

    print("KERNEL_OK")
</pallas_src>

<mosaic_0001>
module attributes {stable_mosaic.version = 11 : i64} {
  func.func @_snpconv_kernel(%arg0: i32, %arg1: i32, %arg2: memref<1x18x18x4xf32, #tpu.memory_space<vmem>>, %arg3: memref<36x128xf32, #tpu.memory_space<vmem>>, %arg4: memref<1x128xf32, #tpu.memory_space<vmem>>, %arg5: memref<1x128x128xf32, #tpu.memory_space<vmem>>) attributes {dimension_semantics = [#tpu.dimension_semantics<parallel>, #tpu.dimension_semantics<parallel>], iteration_bounds = array<i64: 2, 2>, scalar_prefetch = 0 : i64, scratch_operands = 0 : i64, tpu.core_type = #tpu.core_type<tc>, window_params = [{transform_indices = @transform_0, window_bounds = array<i64: 1, 18, 18, 4>}, {pipeline_mode = #tpu.pipeline_mode<synchronous>, transform_indices = @transform_1, window_bounds = array<i64: 36, 128>}, {pipeline_mode = #tpu.pipeline_mode<synchronous>, transform_indices = @transform_2, window_bounds = array<i64: 1, 128>}, {transform_indices = @transform_3, window_bounds = array<i64: 1, 128, 128>}]} {
    %c8_i32 = arith.constant 8 : i32
    %0 = arith.muli %arg1, %c8_i32 : i32
    %1 = tpu.assume_multiple %0, 8 : i32
    %c0 = arith.constant 0 : index
    %2 = arith.index_cast %1 : i32 to index
    %c0_0 = arith.constant 0 : index
    %c0_1 = arith.constant 0 : index
    %3 = vector.load %arg2[%c0, %2, %c0_0, %c0_1] : memref<1x18x18x4xf32, #tpu.memory_space<vmem>>, vector<1x10x18x4xf32>
    %4 = vector.shape_cast %3 : vector<1x10x18x4xf32> to vector<10x18x4xf32>
    %cst = arith.constant 0.000000e+00 : f32
    %5 = vector.broadcast %cst : f32 to vector<10x18x4xf32>
    %6 = arith.maximumf %4, %5 : vector<10x18x4xf32>
    %7 = vector.extract_strided_slice %6 {offsets = [0, 0, 0], sizes = [8, 18, 4], strides = [1, 1, 1]} : vector<10x18x4xf32> to vector<8x18x4xf32>
    %8 = vector.extract_strided_slice %7 {offsets = [0, 0, 0], sizes = [8, 16, 4], strides = [1, 1, 1]} : vector<8x18x4xf32> to vector<8x16x4xf32>
    %9 = vector.extract_strided_slice %7 {offsets = [0, 1, 0], sizes = [8, 16, 4], strides = [1, 1, 1]} : vector<8x18x4xf32> to vector<8x16x4xf32>
    %10 = vector.extract_strided_slice %7 {offsets = [0, 2, 0], sizes = [8, 16, 4], strides = [1, 1, 1]} : vector<8x18x4xf32> to vector<8x16x4xf32>
    %11 = vector.extract_strided_slice %6 {offsets = [1, 0, 0], sizes = [8, 18, 4], strides = [1, 1, 1]} : vector<10x18x4xf32> to vector<8x18x4xf32>
    %12 = vector.extract_strided_slice %11 {offsets = [0, 0, 0], sizes = [8, 16, 4], strides = [1, 1, 1]} : vector<8x18x4xf32> to vector<8x16x4xf32>
    %13 = vector.extract_strided_slice %11 {offsets = [0, 1, 0], sizes = [8, 16, 4], strides = [1, 1, 1]} : vector<8x18x4xf32> to vector<8x16x4xf32>
    %14 = vector.extract_strided_slice %11 {offsets = [0, 2, 0], sizes = [8, 16, 4], strides = [1, 1, 1]} : vector<8x18x4xf32> to vector<8x16x4xf32>
    %15 = vector.extract_strided_slice %6 {offsets = [2, 0, 0], sizes = [8, 18, 4], strides = [1, 1, 1]} : vector<10x18x4xf32> to vector<8x18x4xf32>
    %16 = vector.extract_strided_slice %15 {offsets = [0, 0, 0], sizes = [8, 16, 4], strides = [1, 1, 1]} : vector<8x18x4xf32> to vector<8x16x4xf32>
    %17 = vector.extract_strided_slice %15 {offsets = [0, 1, 0], sizes = [8, 16, 4], strides = [1, 1, 1]} : vector<8x18x4xf32> to vector<8x16x4xf32>
    %18 = vector.extract_strided_slice %15 {offsets = [0, 2, 0], sizes = [8, 16, 4], strides = [1, 1, 1]} : vector<8x18x4xf32> to vector<8x16x4xf32>
    %19 = tpu.concatenate %8, %9, %10, %12, %13, %14, %16, %17, %18 in 2 : vector<8x16x4xf32>, vector<8x16x4xf32>, vector<8x16x4xf32>, vector<8x16x4xf32>, vector<8x16x4xf32>, vector<8x16x4xf32>, vector<8x16x4xf32>, vector<8x16x4xf32>, vector<8x16x4xf32> -> vector<8x16x36xf32>
    %20 = vector.shape_cast %19 : vector<8x16x36xf32> to vector<128x36xf32>
    %c0_2 = arith.constant 0 : index
    %c0_3 = arith.constant 0 : index
    %21 = vector.load %arg3[%c0_2, %c0_3] : memref<36x128xf32, #tpu.memory_space<vmem>>, vector<36x128xf32>
    %cst_4 = arith.constant dense<0.000000e+00> : vector<128x128xf32>
    %22 = tpu.matmul %20, %21, %cst_4 {dimension_numbers = #tpu.dot_dimension_numbers<[1], [0], [0], [1], [0, 0, 1, 1], [], []>} : vector<128x36xf32>, vector<36x128xf32>, vector<128x128xf32> -> vector<128x128xf32>
    %c0_5 = arith.constant 0 : index
    %c0_6 = arith.constant 0 : index
    %23 = vector.load %arg4[%c0_5, %c0_6] : memref<1x128xf32, #tpu.memory_space<vmem>>, vector<1x128xf32>
    %24 = vector.broadcast %23 : vector<1x128xf32> to vector<128x128xf32>
    %25 = arith.addf %22, %24 : vector<128x128xf32>
    %c0_7 = arith.constant 0 : index
    %c0_8 = arith.constant 0 : index
    %c0_9 = arith.constant 0 : index
    %26 = vector.load %arg5[%c0_7, %c0_8, %c0_9] : memref<1x128x128xf32, #tpu.memory_space<vmem>>, vector<1x128x128xf32>
    %27 = vector.shape_cast %26 : vector<1x128x128xf32> to vector<128x128xf32>
    %28 = vector.shape_cast %25 : vector<128x128xf32> to vector<1x128x128xf32>
    tpu.vector_store %arg5[%c0_7, %c0_8, %c0_9], %28 {strides = array<i32>} : memref<1x128x128xf32, #tpu.memory_space<vmem>>, vector<1x128x128xf32>,
    return
  }
  func.func @transform_0(%arg0: i32, %arg1: i32) -> (i32, i32, i32, i32) {
    %c0_i32 = arith.constant 0 : i32
    %c0_i32_0 = arith.constant 0 : i32
    %c0_i32_1 = arith.constant 0 : i32
    %c0_i32_2 = arith.constant 0 : i32
    return %arg0, %c0_i32, %c0_i32_0, %c0_i32_1 : i32, i32, i32, i32
  }
  func.func @transform_1(%arg0: i32, %arg1: i32) -> (i32, i32) {
    %c0_i32 = arith.constant 0 : i32
    %c0_i32_0 = arith.constant 0 : i32
    %c0_i32_1 = arith.constant 0 : i32
    return %c0_i32, %c0_i32_0 : i32, i32
  }
  func.func @transform_2(%arg0: i32, %arg1: i32) -> (i32, i32) {
    %c0_i32 = arith.constant 0 : i32
    %c0_i32_0 = arith.constant 0 : i32
    %c0_i32_1 = arith.constant 0 : i32
    return %c0_i32, %c0_i32_0 : i32, i32
  }
  func.func @transform_3(%arg0: i32, %arg1: i32) -> (i32, i32, i32) {
    %c0_i32 = arith.constant 0 : i32
    %c0_i32_0 = arith.constant 0 : i32
    return %arg0, %arg1, %c0_i32 : i32, i32, i32
  }
}

</mosaic_0001>

<llo_original>
// kernel: tpu_custom_call.1
$region0: #{tpu_custom_call.1}
  #allocation0 [shape = 'u32[]', space=smem, size = 0x4, offset = 0x4, fixed_abs, tag = 'smem constant byte address 0x4 - core index']
  #allocation1 [shape = 'u32[72,128]{1,0:T(1,128)}', space=vmem, size = 0x9000, scoped, tag = 'internal scratch']
  %s0 = inlined_call_operand.vmem [shape: f32[2,18,18,4], index: 0, kind: input, shape index: {}]
  %s1 = inlined_call_operand.vmem [shape: f32[36,128], index: 1, kind: input, shape index: {}]
  %s2 = inlined_call_operand.vmem [shape: f32[1,128], index: 2, kind: input, shape index: {}]
  %s3 = inlined_call_operand.hbm [shape: f32[2,256,128], index: 3, kind: output, shape index: {}]
  %s4 = sld [smem:[#allocation0]]
  $region45: #{tpu_custom_call.1} parent=0
    _
  %s6 = ssub.s32 1, %s4
  %s7 = scalar_select 0, %s6, %s4
  $region1: #{tpu_custom_call.1} parent=0
    #allocation2 [shape = 'u8[131072]{0}', space=vmem, size = 0x20000, scoped, tag = 'output window, operand 0']
    #allocation3 [shape = 's32[2]{0}', space=sflag, size = 0x8, scoped, tag = 'scoped memory for tpu_custom_call.1']
    %8 = vsyncpa [#allocation3], 0
    %s9 = scalar_lea.sflag [#allocation3], 1
    %10 = vsyncpa %s9, 0
    loop: start=0, step=1, limit=6
    $region2: #{tpu_custom_call.1} parent=1 // loop_pre_header
      _
    $region3: #{tpu_custom_call.1} parent=1 // loop_header
      %s12 = sphi 0, %s16
      %p13 = scmp.ge.s32.totalorder %s12, 6
      %s19 = sphi 0, %s31
      %s20 = sphi 0, %s27
      %s21 = sphi 0, %s19
      %s22 = sphi 0, %s20
      %s23 = sphi 0, %s21
      %s24 = sphi 0, %s22
      %s34 = sphi 0, %s36
      %s37 = sphi 0, %s34
      %s38 = sphi 0, %s37
      %s54 = sphi 0, %s38
      %s58 = sphi 0, %s58
      %s60 = sphi 0, %s58
      %s61 = sphi 0, %s60
      %s75 = sphi 0, %s61
      %s79 = sphi 0, %s79
      %s81 = sphi 0, %s79
      %s82 = sphi 0, %s81
      %s96 = sphi 0, %s82
      %s104 = sphi 0, %s106
      %s107 = sphi 0, %s104
      %s108 = sphi 0, %s107
      %s124 = sphi 0, %s108
    $region4: #{tpu_custom_call.1} parent=1 // loop_header_branch
      %15 = sbr.rel (%p13) target = $region8
    $region5: #{tpu_custom_call.1} parent=1 // loop_body
      %s17 = ssub.s32 %s12, 1
      %s18 = ssub.s32 %s12, 2
      %s25 = sadd.s32 1, %s20
      %p26 = scmp.ge.s32.totalorder %s25, 2
      %s27 = scalar_select %p26, 0, %s25
      %s28 = sadd.s32 1, %s19
      %s29 = scalar_select %p26, %s28, %s19
      %p30 = scmp.ge.s32.totalorder %s29, 2
      %s31 = scalar_select %p30, 0, %s29
      %s32 = ssub.s32 %s19, %s31
      %p33 = scmp.eq.s32.totalorder %s32, 0
      %s35 = sadd.s32 %s34, 1
      %s36 = scalar_select %p33, %s34, %s35
      %p39 = pneg %p33
      %p40 = scmp.eq.s32.totalorder %s12, 3
      %p41 = por %p39, %p40
      %p42 = scmp.ne.s32.totalorder %s34, %s37
      %p43 = scmp.eq.s32.totalorder %s12, 0
      %p44 = por %p42, %p43
      %p45 = scmp.ne.s32.totalorder %s34, %s37
      %p46 = scmp.eq.s32.totalorder %s17, 3
      %p47 = por %p45, %p46
      %p48 = scmp.ne.s32.totalorder %s37, %s38
      %p49 = scmp.eq.s32.totalorder %s17, 0
      %p50 = por %p48, %p49
      %p51 = scmp.ne.s32.totalorder %s37, %s38
      %p52 = scmp.eq.s32.totalorder %s18, 3
      %p53 = por %p51, %p52
      %p55 = scmp.ne.s32.totalorder %s38, %s54
      %p56 = scmp.eq.s32.totalorder %s18, 0
      %p57 = por %p55, %p56
      %s59 = sadd.s32 %s58, 1
      %p62 = scmp.eq.s32.totalorder %s12, 3
      %p63 = scmp.ne.s32.totalorder %s58, %s60
      %p64 = scmp.eq.s32.totalorder %s12, 0
      %p65 = por %p63, %p64
      %p66 = scmp.ne.s32.totalorder %s58, %s60
      %p67 = scmp.eq.s32.totalorder %s17, 3
      %p68 = por %p66, %p67
      %p69 = scmp.ne.s32.totalorder %s60, %s61
      %p70 = scmp.eq.s32.totalorder %s17, 0
      %p71 = por %p69, %p70
      %p72 = scmp.ne.s32.totalorder %s60, %s61
      %p73 = scmp.eq.s32.totalorder %s18, 3
      %p74 = por %p72, %p73
      %p76 = scmp.ne.s32.totalorder %s61, %s75
      %p77 = scmp.eq.s32.totalorder %s18, 0
      %p78 = por %p76, %p77
      %s80 = sadd.s32 %s79, 1
      %p83 = scmp.eq.s32.totalorder %s12, 3
      %p84 = scmp.ne.s32.totalorder %s79, %s81
      %p85 = scmp.eq.s32.totalorder %s12, 0
      %p86 = por %p84, %p85
      %p87 = scmp.ne.s32.totalorder %s79, %s81
      %p88 = scmp.eq.s32.totalorder %s17, 3
      %p89 = por %p87, %p88
      %p90 = scmp.ne.s32.totalorder %s81, %s82
      %p91 = scmp.eq.s32.totalorder %s17, 0
      %p92 = por %p90, %p91
      %p93 = scmp.ne.s32.totalorder %s81, %s82
      %p94 = scmp.eq.s32.totalorder %s18, 3
      %p95 = por %p93, %p94
      %p97 = scmp.ne.s32.totalorder %s82, %s96
      %p98 = scmp.eq.s32.totalorder %s18, 0
      %p99 = por %p97, %p98
      %s100 = ssub.s32 %s19, %s31
      %s101 = ssub.s32 %s20, %s27
      %s102 = sor.u32 %s100, %s101
      %p103 = scmp.eq.s32.totalorder %s102, 0
      %s105 = sadd.s32 %s104, 1
      %s106 = scalar_select %p103, %s104, %s105
      %p109 = pneg %p103
      %p110 = scmp.eq.s32.totalorder %s12, 3
      %p111 = por %p109, %p110
      %p112 = scmp.ne.s32.totalorder %s104, %s107
      %p113 = scmp.eq.s32.totalorder %s12, 0
      %p114 = por %p112, %p113
      %p115 = scmp.ne.s32.totalorder %s104, %s107
      %p116 = scmp.eq.s32.totalorder %s17, 3
      %p117 = por %p115, %p116
      %p118 = scmp.ne.s32.totalorder %s107, %s108
      %p119 = scmp.eq.s32.totalorder %s17, 0
      %p120 = por %p118, %p119
      %p121 = scmp.ne.s32.totalorder %s107, %s108
      %p122 = scmp.eq.s32.totalorder %s18, 3
      %p123 = por %p121, %p122
      %p125 = scmp.ne.s32.totalorder %s108, %s124
      %p126 = scmp.eq.s32.totalorder %s18, 0
      %p127 = por %p125, %p126
      %p128 = scmp.le.s32.totalorder 1, %s12
      %p129 = scmp.lt.s32.totalorder %s12, 5
      %p130 = pnand %p128, %p129
      %p131 = pneg %p130
      // Predicated region
      $region9: #{tpu_custom_call.1} parent=5 // pred_check
        _
      $region10: #{tpu_custom_call.1} parent=5 // pred_check_branch
        %133 = sbr.rel (%p130) target = $region12
      $region11: #{tpu_custom_call.1} parent=5 // pred_region
        %s134 = ssub.s32 %s12, 1
        // Predicated region
        $region13: #{tpu_custom_call.1} parent=11 // pred_check
          %p135 = pneg %p71
        $region14: #{tpu_custom_call.1} parent=11 // pred_check_branch
          %137 = sbr.rel (%p135) target = $region16
        $region15: #{tpu_custom_call.1} parent=11 // pred_region
          _
        $region16: #{tpu_custom_call.1} parent=11 // pred_fallthru
          _
        // Predicated region
        $region17: #{tpu_custom_call.1} parent=11 // pred_check
          %p138 = pneg %p92
        $region18: #{tpu_custom_call.1} parent=11 // pred_check_branch
          %140 = sbr.rel (%p138) target = $region20
        $region19: #{tpu_custom_call.1} parent=11 // pred_region
          _
        $region20: #{tpu_custom_call.1} parent=11 // pred_fallthru
          _
      $region12: #{tpu_custom_call.1} parent=5 // pred_fallthru
        _
      %p141 = scmp.lt.s32.totalorder %s12, 4
      // Predicated region
      $region21: #{tpu_custom_call.1} parent=5 // pred_check
        %p142 = pneg %p141
      $region22: #{tpu_custom_call.1} parent=5 // pred_check_branch
        %144 = sbr.rel (%p142) target = $region24
      $region23: #{tpu_custom_call.1} parent=5 // pred_region
        // Predicated region
        $region25: #{tpu_custom_call.1} parent=23 // pred_check
          %p145 = pneg %p44
        $region26: #{tpu_custom_call.1} parent=23 // pred_check_branch
          %147 = sbr.rel (%p145) target = $region28
        $region27: #{tpu_custom_call.1} parent=23 // pred_region
          %p148 = scmp.lt.s32.totalorder %s19, 1
          %s149 = scalar_select %p148, %s19, 1
          %s150 = smul.addr %s149, 54
          %s151 = smul.addr %s150, 8
          %s152 = scalar_lea.vmem %s0, %s151
        $region28: #{tpu_custom_call.1} parent=23 // pred_fallthru
          _
      $region24: #{tpu_custom_call.1} parent=5 // pred_fallthru
        _
      %p153 = scmp.le.s32.totalorder 1, %s12
      %p154 = scmp.lt.s32.totalorder %s12, 5
      %p155 = pnand %p153, %p154
      %p156 = pneg %p155
      // Predicated region
      $region29: #{tpu_custom_call.1} parent=5 // pred_check
        _
      $region30: #{tpu_custom_call.1} parent=5 // pred_check_branch
        %158 = sbr.rel (%p155) target = $region32
      $region31: #{tpu_custom_call.1} parent=5 // pred_region
        %s159 = ssub.s32 %s12, 1
        %p160 = scmp.lt.s32.totalorder %s21, 1
        %s161 = scalar_select %p160, %s21, 1
        %s162 = smul.addr %s161, 54
        %s163 = smul.addr %s162, 8
        %s164 = scalar_lea.vmem %s0, %s163
        %p165 = pneg %p50
        %p166 = pneg %p47
        %p167 = pneg %p71
        %p168 = pneg %p68
        %p169 = pneg %p92
        %p170 = pneg %p89
        %p171 = pneg %p120
        %p172 = pneg %p117
        %s173 = sand.u32 %s107, 1
        %s174 = scalar_lea.sflag [#allocation3], %s173
        %s175 = sand.u32 %s107, 1
        %s176 = smul.addr %s175, 128
        %s177 = scalar_lea.vmem [#allocation2], %s176
        %p178 = scmp.lt.s32.totalorder %s21, 1
        %s179 = scalar_select %p178, %s21, 1
        %s180 = smul.addr %s179, 54
        %s181 = smul.addr %s180, 8
        %s182 = scalar_lea.vmem %s0, %s181
        %s183 = smul.u32 16, %s22
        %s184 = smul.u32 %s22, 8
        %s185 = smul.u32 %s184, 24
        %s186 = scalar_lea.vmem %s182, %s185
        %v187 = vld [vmem:[%s186] sm:$0xff]
        %v188 = vld [vmem:[%s186 + $0x8] sm:$0xff]
        %v189 = vld [vmem:[%s186 + $0x10] sm:$0x3]
        %v190 = vld [vmem:[%s186 + $0x18] sm:$0xff]
        %v191 = vld [vmem:[%s186 + $0x20] sm:$0xff]
        %v192 = vld [vmem:[%s186 + $0x28] sm:$0x3]
        %v193 = vld [vmem:[%s186 + $0x30] sm:$0xff]
        %v194 = vld [vmem:[%s186 + $0x38] sm:$0xff]
        %v195 = vld [vmem:[%s186 + $0x40] sm:$0x3]
        %v196 = vld [vmem:[%s186 + $0x48] sm:$0xff]
        %v197 = vld [vmem:[%s186 + $0x50] sm:$0xff]
        %v198 = vld [vmem:[%s186 + $0x58] sm:$0x3]
        %v199 = vld [vmem:[%s186 + $0x60] sm:$0xff]
        %v200 = vld [vmem:[%s186 + $0x68] sm:$0xff]
        %v201 = vld [vmem:[%s186 + $0x70] sm:$0x3]
        %v202 = vld [vmem:[%s186 + $0x78] sm:$0xff]
        %v203 = vld [vmem:[%s186 + $0x80] sm:$0xff]
        %v204 = vld [vmem:[%s186 + $0x88] sm:$0x3]
        %v205 = vld [vmem:[%s186 + $0x90] sm:$0xff]
        %v206 = vld [vmem:[%s186 + $0x98] sm:$0xff]
        %v207 = vld [vmem:[%s186 + $0xa0] sm:$0x3]
        %v208 = vld [vmem:[%s186 + $0xa8] sm:$0xff]
        %v209 = vld [vmem:[%s186 + $0xb0] sm:$0xff]
        %v210 = vld [vmem:[%s186 + $0xb8] sm:$0x3]
        %v211 = vld [vmem:[%s186 + $0xc0] sm:$0xff]
        %v212 = vld [vmem:[%s186 + $0xc8] sm:$0xff]
        %v213 = vld [vmem:[%s186 + $0xd0] sm:$0x3]
        %v214 = vld [vmem:[%s186 + $0xd8] sm:$0xff]
        %v215 = vld [vmem:[%s186 + $0xe0] sm:$0xff]
        %v216 = vld [vmem:[%s186 + $0xe8] sm:$0x3]
        %v217 = vmax.f32 %v187, 0.0
        %v218 = vmax.f32 %v188, 0.0
        %v219 = vmax.f32 %v189, 0.0
        %v220 = vmax.f32 %v190, 0.0
        %v221 = vmax.f32 %v191, 0.0
        %v222 = vmax.f32 %v192, 0.0
        %v223 = vmax.f32 %v193, 0.0
        %v224 = vmax.f32 %v194, 0.0
        %v225 = vmax.f32 %v195, 0.0
        %v226 = vmax.f32 %v196, 0.0
        %v227 = vmax.f32 %v197, 0.0
        %v228 = vmax.f32 %v198, 0.0
        %v229 = vmax.f32 %v199, 0.0
        %v230 = vmax.f32 %v200, 0.0
        %v231 = vmax.f32 %v201, 0.0
        %v232 = vmax.f32 %v202, 0.0
        %v233 = vmax.f32 %v203, 0.0
        %v234 = vmax.f32 %v204, 0.0
        %v235 = vmax.f32 %v205, 0.0
        %v236 = vmax.f32 %v206, 0.0
        %v237 = vmax.f32 %v207, 0.0
        %v238 = vmax.f32 %v208, 0.0
        %v239 = vmax.f32 %v209, 0.0
        %v240 = vmax.f32 %v210, 0.0
        %v241 = vmax.f32 %v211, 0.0
        %v242 = vmax.f32 %v212, 0.0
        %v243 = vmax.f32 %v213, 0.0
        %v244 = vmax.f32 %v214, 0.0
        %v245 = vmax.f32 %v215, 0.0
        %v246 = vmax.f32 %v216, 0.0
        %vm271 = vcmask 1046528
        %v272 = vrot.slane %v217, 1
        %v273 = vrot.slane %v218, 1
        %v274 = vsel %vm271, %v272, %v273
        %v275 = vrot.slane %v219, 1
        %v276 = vsel %vm271, %v273, %v275
        %v277 = vrot.slane %v220, 1
        %v278 = vrot.slane %v221, 1
        %v279 = vsel %vm271, %v277, %v278
        %v280 = vrot.slane %v222, 1
        %v281 = vsel %vm271, %v278, %v280
        %v282 = vrot.slane %v223, 1
        %v283 = vrot.slane %v224, 1
        %v284 = vsel %vm271, %v282, %v283
        %v285 = vrot.slane %v225, 1
        %v286 = vsel %vm271, %v283, %v285
        %v287 = vrot.slane %v226, 1
        %v288 = vrot.slane %v227, 1
        %v289 = vsel %vm271, %v287, %v288
        %v290 = vrot.slane %v228, 1
        %v291 = vsel %vm271, %v288, %v290
        %v292 = vrot.slane %v229, 1
        %v293 = vrot.slane %v230, 1
        %v294 = vsel %vm271, %v292, %v293
        %v295 = vrot.slane %v231, 1
        %v296 = vsel %vm271, %v293, %v295
        %v297 = vrot.slane %v232, 1
        %v298 = vrot.slane %v233, 1
        %v299 = vsel %vm271, %v297, %v298
        %v300 = vrot.slane %v234, 1
        %v301 = vsel %vm271, %v298, %v300
        %v302 = vrot.slane %v235, 1
        %v303 = vrot.slane %v236, 1
        %v304 = vsel %vm271, %v302, %v303
        %v305 = vrot.slane %v237, 1
        %v306 = vsel %vm271, %v303, %v305
        %v307 = vrot.slane %v238, 1
        %v308 = vrot.slane %v239, 1
        %v309 = vsel %vm271, %v307, %v308
        %v310 = vrot.slane %v240, 1
        %v311 = vsel %vm271, %v308, %v310
        %312 = vrot.lane.b32.xlu0 %v274, 4
        %v313 = vpop.permute.xlu0 %312
        %314 = vrot.lane.b32.xlu0 %v276, 4
        %v315 = vpop.permute.xlu0 %314
        %316 = vrot.lane.b32.xlu0 %v279, 4
        %v317 = vpop.permute.xlu0 %316
        %318 = vrot.lane.b32.xlu0 %v281, 4
        %v319 = vpop.permute.xlu0 %318
        %320 = vrot.lane.b32.xlu0 %v284, 4
        %v321 = vpop.permute.xlu0 %320
        %322 = vrot.lane.b32.xlu0 %v286, 4
        %v323 = vpop.permute.xlu0 %322
        %324 = vrot.lane.b32.xlu0 %v289, 4
        %v325 = vpop.permute.xlu0 %324
        %326 = vrot.lane.b32.xlu0 %v291, 4
        %v327 = vpop.permute.xlu0 %326
        %328 = vrot.lane.b32.xlu0 %v294, 4
        %v329 = vpop.permute.xlu0 %328
        %330 = vrot.lane.b32.xlu0 %v296, 4
        %v331 = vpop.permute.xlu0 %330
        %332 = vrot.lane.b32.xlu0 %v299, 4
        %v333 = vpop.permute.xlu0 %332
        %334 = vrot.lane.b32.xlu0 %v301, 4
        %v335 = vpop.permute.xlu0 %334
        %336 = vrot.lane.b32.xlu0 %v304, 4
        %v337 = vpop.permute.xlu0 %336
        %338 = vrot.lane.b32.xlu0 %v306, 4
        %v339 = vpop.permute.xlu0 %338
        %340 = vrot.lane.b32.xlu0 %v309, 4
        %v341 = vpop.permute.xlu0 %340
        %342 = vrot.lane.b32.xlu0 %v311, 4
        %v343 = vpop.permute.xlu0 %342
        %vm360 = vcmask 1045504
        %v361 = vrot.slane %v217, 2
        %v362 = vrot.slane %v218, 2
        %v363 = vsel %vm360, %v361, %v362
        %v364 = vrot.slane %v219, 2
        %v365 = vsel %vm360, %v362, %v364
        %v366 = vrot.slane %v220, 2
        %v367 = vrot.slane %v221, 2
        %v368 = vsel %vm360, %v366, %v367
        %v369 = vrot.slane %v222, 2
        %v370 = vsel %vm360, %v367, %v369
        %v371 = vrot.slane %v223, 2
        %v372 = vrot.slane %v224, 2
        %v373 = vsel %vm360, %v371, %v372
        %v374 = vrot.slane %v225, 2
        %v375 = vsel %vm360, %v372, %v374
        %v376 = vrot.slane %v226, 2
        %v377 = vrot.slane %v227, 2
        %v378 = vsel %vm360, %v376, %v377
        %v379 = vrot.slane %v228, 2
        %v380 = vsel %vm360, %v377, %v379
        %v381 = vrot.slane %v229, 2
        %v382 = vrot.slane %v230, 2
        %v383 = vsel %vm360, %v381, %v382
        %v384 = vrot.slane %v231, 2
        %v385 = vsel %vm360, %v382, %v384
        %v386 = vrot.slane %v232, 2
        %v387 = vrot.slane %v233, 2
        %v388 = vsel %vm360, %v386, %v387
        %v389 = vrot.slane %v234, 2
        %v390 = vsel %vm360, %v387, %v389
        %v391 = vrot.slane %v235, 2
        %v392 = vrot.slane %v236, 2
        %v393 = vsel %vm360, %v391, %v392
        %v394 = vrot.slane %v237, 2
        %v395 = vsel %vm360, %v392, %v394
        %v396 = vrot.slane %v238, 2
        %v397 = vrot.slane %v239, 2
        %v398 = vsel %vm360, %v396, %v397
        %v399 = vrot.slane %v240, 2
        %v400 = vsel %vm360, %v397, %v399
        %401 = vrot.lane.b32.xlu0 %v363, 8
        %v402 = vpop.permute.xlu0 %401
        %403 = vrot.lane.b32.xlu0 %v365, 8
        %v404 = vpop.permute.xlu0 %403
        %405 = vrot.lane.b32.xlu0 %v368, 8
        %v406 = vpop.permute.xlu0 %405
        %407 = vrot.lane.b32.xlu0 %v370, 8
        %v408 = vpop.permute.xlu0 %407
        %409 = vrot.lane.b32.xlu0 %v373, 8
        %v410 = vpop.permute.xlu0 %409
        %411 = vrot.lane.b32.xlu0 %v375, 8
        %v412 = vpop.permute.xlu0 %411
        %413 = vrot.lane.b32.xlu0 %v378, 8
        %v414 = vpop.permute.xlu0 %413
        %415 = vrot.lane.b32.xlu0 %v380, 8
        %v416 = vpop.permute.xlu0 %415
        %417 = vrot.lane.b32.xlu0 %v383, 8
        %v418 = vpop.permute.xlu0 %417
        %419 = vrot.lane.b32.xlu0 %v385, 8
        %v420 = vpop.permute.xlu0 %419
        %421 = vrot.lane.b32.xlu0 %v388, 8
        %v422 = vpop.permute.xlu0 %421
        %423 = vrot.lane.b32.xlu0 %v390, 8
        %v424 = vpop.permute.xlu0 %423
        %425 = vrot.lane.b32.xlu0 %v393, 8
        %v426 = vpop.permute.xlu0 %425
        %427 = vrot.lane.b32.xlu0 %v395, 8
        %v428 = vpop.permute.xlu0 %427
        %429 = vrot.lane.b32.xlu0 %v398, 8
        %v430 = vpop.permute.xlu0 %429
        %431 = vrot.lane.b32.xlu0 %v400, 8
        %v432 = vpop.permute.xlu0 %431
        %451 = vrot.lane.b32.xlu0 %v220, 12
        %v452 = vpop.permute.xlu0 %451
        %453 = vrot.lane.b32.xlu0 %v221, 12
        %v454 = vpop.permute.xlu0 %453
        %455 = vrot.lane.b32.xlu0 %v223, 12
        %v456 = vpop.permute.xlu0 %455
        %457 = vrot.lane.b32.xlu0 %v224, 12
        %v458 = vpop.permute.xlu0 %457
        %459 = vrot.lane.b32.xlu0 %v226, 12
        %v460 = vpop.permute.xlu0 %459
        %461 = vrot.lane.b32.xlu0 %v227, 12
        %v462 = vpop.permute.xlu0 %461
        %463 = vrot.lane.b32.xlu0 %v229, 12
        %v464 = vpop.permute.xlu0 %463
        %465 = vrot.lane.b32.xlu0 %v230, 12
        %v466 = vpop.permute.xlu0 %465
        %467 = vrot.lane.b32.xlu0 %v232, 12
        %v468 = vpop.permute.xlu0 %467
        %469 = vrot.lane.b32.xlu0 %v233, 12
        %v470 = vpop.permute.xlu0 %469
        %471 = vrot.lane.b32.xlu0 %v235, 12
        %v472 = vpop.permute.xlu0 %471
        %473 = vrot.lane.b32.xlu0 %v236, 12
        %v474 = vpop.permute.xlu0 %473
        %475 = vrot.lane.b32.xlu0 %v238, 12
        %v476 = vpop.permute.xlu0 %475
        %477 = vrot.lane.b32.xlu0 %v239, 12
        %v478 = vpop.permute.xlu0 %477
        %479 = vrot.lane.b32.xlu0 %v241, 12
        %v480 = vpop.permute.xlu0 %479
        %481 = vrot.lane.b32.xlu0 %v242, 12
        %v482 = vpop.permute.xlu0 %481
        %v500 = vrot.slane %v241, 1
        %v501 = vrot.slane %v242, 1
        %v502 = vsel %vm271, %v500, %v501
        %v503 = vrot.slane %v243, 1
        %v504 = vsel %vm271, %v501, %v503
        %505 = vrot.lane.b32.xlu0 %v279, 16
        %v506 = vpop.permute.xlu0 %505
        %507 = vrot.lane.b32.xlu0 %v281, 16
        %v508 = vpop.permute.xlu0 %507
        %509 = vrot.lane.b32.xlu0 %v284, 16
        %v510 = vpop.permute.xlu0 %509
        %511 = vrot.lane.b32.xlu0 %v286, 16
        %v512 = vpop.permute.xlu0 %511
        %513 = vrot.lane.b32.xlu0 %v289, 16
        %v514 = vpop.permute.xlu0 %513
        %515 = vrot.lane.b32.xlu0 %v291, 16
        %v516 = vpop.permute.xlu0 %515
        %517 = vrot.lane.b32.xlu0 %v294, 16
        %v518 = vpop.permute.xlu0 %517
        %519 = vrot.lane.b32.xlu0 %v296, 16
        %v520 = vpop.permute.xlu0 %519
        %521 = vrot.lane.b32.xlu0 %v299, 16
        %v522 = vpop.permute.xlu0 %521
        %523 = vrot.lane.b32.xlu0 %v301, 16
        %v524 = vpop.permute.xlu0 %523
        %525 = vrot.lane.b32.xlu0 %v304, 16
        %v526 = vpop.permute.xlu0 %525
        %527 = vrot.lane.b32.xlu0 %v306, 16
        %v528 = vpop.permute.xlu0 %527
        %529 = vrot.lane.b32.xlu0 %v309, 16
        %v530 = vpop.permute.xlu0 %529
        %531 = vrot.lane.b32.xlu0 %v311, 16
        %v532 = vpop.permute.xlu0 %531
        %533 = vrot.lane.b32.xlu0 %v502, 16
        %v534 = vpop.permute.xlu0 %533
        %535 = vrot.lane.b32.xlu0 %v504, 16
        %v536 = vpop.permute.xlu0 %535
        %v553 = vrot.slane %v241, 2
        %v554 = vrot.slane %v242, 2
        %v555 = vsel %vm360, %v553, %v554
        %v556 = vrot.slane %v243, 2
        %v557 = vsel %vm360, %v554, %v556
        %558 = vrot.lane.b32.xlu0 %v368, 20
        %v559 = vpop.permute.xlu0 %558
        %560 = vrot.lane.b32.xlu0 %v370, 20
        %v561 = vpop.permute.xlu0 %560
        %562 = vrot.lane.b32.xlu0 %v373, 20
        %v563 = vpop.permute.xlu0 %562
        %564 = vrot.lane.b32.xlu0 %v375, 20
        %v565 = vpop.permute.xlu0 %564
        %566 = vrot.lane.b32.xlu0 %v378, 20
        %v567 = vpop.permute.xlu0 %566
        %568 = vrot.lane.b32.xlu0 %v380, 20
        %v569 = vpop.permute.xlu0 %568
        %570 = vrot.lane.b32.xlu0 %v383, 20
        %v571 = vpop.permute.xlu0 %570
        %572 = vrot.lane.b32.xlu0 %v385, 20
        %v573 = vpop.permute.xlu0 %572
        %574 = vrot.lane.b32.xlu0 %v388, 20
        %v575 = vpop.permute.xlu0 %574
        %576 = vrot.lane.b32.xlu0 %v390, 20
        %v577 = vpop.permute.xlu0 %576
        %578 = vrot.lane.b32.xlu0 %v393, 20
        %v579 = vpop.permute.xlu0 %578
        %580 = vrot.lane.b32.xlu0 %v395, 20
        %v581 = vpop.permute.xlu0 %580
        %582 = vrot.lane.b32.xlu0 %v398, 20
        %v583 = vpop.permute.xlu0 %582
        %584 = vrot.lane.b32.xlu0 %v400, 20
        %v585 = vpop.permute.xlu0 %584
        %586 = vrot.lane.b32.xlu0 %v555, 20
        %v587 = vpop.permute.xlu0 %586
        %588 = vrot.lane.b32.xlu0 %v557, 20
        %v589 = vpop.permute.xlu0 %588
        %608 = vrot.lane.b32.xlu0 %v223, 24
        %v609 = vpop.permute.xlu0 %608
        %610 = vrot.lane.b32.xlu0 %v224, 24
        %v611 = vpop.permute.xlu0 %610
        %612 = vrot.lane.b32.xlu0 %v226, 24
        %v613 = vpop.permute.xlu0 %612
        %614 = vrot.lane.b32.xlu0 %v227, 24
        %v615 = vpop.permute.xlu0 %614
        %616 = vrot.lane.b32.xlu0 %v229, 24
        %v617 = vpop.permute.xlu0 %616
        %618 = vrot.lane.b32.xlu0 %v230, 24
        %v619 = vpop.permute.xlu0 %618
        %620 = vrot.lane.b32.xlu0 %v232, 24
        %v621 = vpop.permute.xlu0 %620
        %622 = vrot.lane.b32.xlu0 %v233, 24
        %v623 = vpop.permute.xlu0 %622
        %624 = vrot.lane.b32.xlu0 %v235, 24
        %v625 = vpop.permute.xlu0 %624
        %626 = vrot.lane.b32.xlu0 %v236, 24
        %v627 = vpop.permute.xlu0 %626
        %628 = vrot.lane.b32.xlu0 %v238, 24
        %v629 = vpop.permute.xlu0 %628
        %630 = vrot.lane.b32.xlu0 %v239, 24
        %v631 = vpop.permute.xlu0 %630
        %632 = vrot.lane.b32.xlu0 %v241, 24
        %v633 = vpop.permute.xlu0 %632
        %634 = vrot.lane.b32.xlu0 %v242, 24
        %v635 = vpop.permute.xlu0 %634
        %636 = vrot.lane.b32.xlu0 %v244, 24
        %v637 = vpop.permute.xlu0 %636
        %638 = vrot.lane.b32.xlu0 %v245, 24
        %v639 = vpop.permute.xlu0 %638
        %v657 = vrot.slane %v244, 1
        %v658 = vrot.slane %v245, 1
        %v659 = vsel %vm271, %v657, %v658
        %v660 = vrot.slane %v246, 1
        %v661 = vsel %vm271, %v658, %v660
        %662 = vrot.lane.b32.xlu0 %v284, 28
        %v663 = vpop.permute.xlu0 %662
        %664 = vrot.lane.b32.xlu0 %v286, 28
        %v665 = vpop.permute.xlu0 %664
        %666 = vrot.lane.b32.xlu0 %v289, 28
        %v667 = vpop.permute.xlu0 %666
        %668 = vrot.lane.b32.xlu0 %v291, 28
        %v669 = vpop.permute.xlu0 %668
        %670 = vrot.lane.b32.xlu0 %v294, 28
        %v671 = vpop.permute.xlu0 %670
        %672 = vrot.lane.b32.xlu0 %v296, 28
        %v673 = vpop.permute.xlu0 %672
        %674 = vrot.lane.b32.xlu0 %v299, 28
        %v675 = vpop.permute.xlu0 %674
        %676 = vrot.lane.b32.xlu0 %v301, 28
        %v677 = vpop.permute.xlu0 %676
        %678 = vrot.lane.b32.xlu0 %v304, 28
        %v679 = vpop.permute.xlu0 %678
        %680 = vrot.lane.b32.xlu0 %v306, 28
        %v681 = vpop.permute.xlu0 %680
        %682 = vrot.lane.b32.xlu0 %v309, 28
        %v683 = vpop.permute.xlu0 %682
        %684 = vrot.lane.b32.xlu0 %v311, 28
        %v685 = vpop.permute.xlu0 %684
        %686 = vrot.lane.b32.xlu0 %v502, 28
        %v687 = vpop.permute.xlu0 %686
        %688 = vrot.lane.b32.xlu0 %v504, 28
        %v689 = vpop.permute.xlu0 %688
        %690 = vrot.lane.b32.xlu0 %v659, 28
        %v691 = vpop.permute.xlu0 %690
        %692 = vrot.lane.b32.xlu0 %v661, 28
        %v693 = vpop.permute.xlu0 %692
        %v710 = vrot.slane %v244, 2
        %v711 = vrot.slane %v245, 2
        %v712 = vsel %vm360, %v710, %v711
        %v713 = vrot.slane %v246, 2
        %v714 = vsel %vm360, %v711, %v713
        %715 = vrot.lane.b32.xlu0 %v373, 32
        %v716 = vpop.permute.xlu0 %715
        %717 = vrot.lane.b32.xlu0 %v375, 32
        %v718 = vpop.permute.xlu0 %717
        %719 = vrot.lane.b32.xlu0 %v378, 32
        %v720 = vpop.permute.xlu0 %719
        %721 = vrot.lane.b32.xlu0 %v380, 32
        %v722 = vpop.permute.xlu0 %721
        %723 = vrot.lane.b32.xlu0 %v383, 32
        %v724 = vpop.permute.xlu0 %723
        %725 = vrot.lane.b32.xlu0 %v385, 32
        %v726 = vpop.permute.xlu0 %725
        %727 = vrot.lane.b32.xlu0 %v388, 32
        %v728 = vpop.permute.xlu0 %727
        %729 = vrot.lane.b32.xlu0 %v390, 32
        %v730 = vpop.permute.xlu0 %729
        %731 = vrot.lane.b32.xlu0 %v393, 32
        %v732 = vpop.permute.xlu0 %731
        %733 = vrot.lane.b32.xlu0 %v395, 32
        %v734 = vpop.permute.xlu0 %733
        %735 = vrot.lane.b32.xlu0 %v398, 32
        %v736 = vpop.permute.xlu0 %735
        %737 = vrot.lane.b32.xlu0 %v400, 32
        %v738 = vpop.permute.xlu0 %737
        %739 = vrot.lane.b32.xlu0 %v555, 32
        %v740 = vpop.permute.xlu0 %739
        %741 = vrot.lane.b32.xlu0 %v557, 32
        %v742 = vpop.permute.xlu0 %741
        %743 = vrot.lane.b32.xlu0 %v712, 32
        %v744 = vpop.permute.xlu0 %743
        %745 = vrot.lane.b32.xlu0 %v714, 32
        %v746 = vpop.permute.xlu0 %745
        %vm763 = vcmask 31744
        %v764 = vsel %vm763, %v217, %v313
        %v765 = vsel %vm763, %v218, %v315
        %v766 = vsel %vm763, %v220, %v317
        %v767 = vsel %vm763, %v221, %v319
        %v768 = vsel %vm763, %v223, %v321
        %v769 = vsel %vm763, %v224, %v323
        %v770 = vsel %vm763, %v226, %v325
        %v771 = vsel %vm763, %v227, %v327
        %v772 = vsel %vm763, %v229, %v329
        %v773 = vsel %vm763, %v230, %v331
        %v774 = vsel %vm763, %v232, %v333
        %v775 = vsel %vm763, %v233, %v335
        %v776 = vsel %vm763, %v235, %v337
        %v777 = vsel %vm763, %v236, %v339
        %v778 = vsel %vm763, %v238, %v341
        %v779 = vsel %vm763, %v239, %v343
        %vm780 = vcmask 64512
        %v781 = vsel %vm780, %v764, %v402
        %v782 = vsel %vm780, %v765, %v404
        %v783 = vsel %vm780, %v766, %v406
        %v784 = vsel %vm780, %v767, %v408
        %v785 = vsel %vm780, %v768, %v410
        %v786 = vsel %vm780, %v769, %v412
        %v787 = vsel %vm780, %v770, %v414
        %v788 = vsel %vm780, %v771, %v416
        %v789 = vsel %vm780, %v772, %v418
        %v790 = vsel %vm780, %v773, %v420
        %v791 = vsel %vm780, %v774, %v422
        %v792 = vsel %vm780, %v775, %v424
        %v793 = vsel %vm780, %v776, %v426
        %v794 = vsel %vm780, %v777, %v428
        %v795 = vsel %vm780, %v778, %v430
        %v796 = vsel %vm780, %v779, %v432
        %vm797 = vcmask 97280
        %v798 = vsel %vm797, %v781, %v452
        %v799 = vsel %vm797, %v782, %v454
        %v800 = vsel %vm797, %v783, %v456
        %v801 = vsel %vm797, %v784, %v458
        %v802 = vsel %vm797, %v785, %v460
        %v803 = vsel %vm797, %v786, %v462
        %v804 = vsel %vm797, %v787, %v464
        %v805 = vsel %vm797, %v788, %v466
        %v806 = vsel %vm797, %v789, %v468
        %v807 = vsel %vm797, %v790, %v470
        %v808 = vsel %vm797, %v791, %v472
        %v809 = vsel %vm797, %v792, %v474
        %v810 = vsel %vm797, %v793, %v476
        %v811 = vsel %vm797, %v794, %v478
        %v812 = vsel %vm797, %v795, %v480
        %v813 = vsel %vm797, %v796, %v482
        %vm814 = vcmask 130048
        %v815 = vsel %vm814, %v798, %v506
        %v816 = vsel %vm814, %v799, %v508
        %v817 = vsel %vm814, %v800, %v510
        %v818 = vsel %vm814, %v801, %v512
        %v819 = vsel %vm814, %v802, %v514
        %v820 = vsel %vm814, %v803, %v516
        %v821 = vsel %vm814, %v804, %v518
        %v822 = vsel %vm814, %v805, %v520
        %v823 = vsel %vm814, %v806, %v522
        %v824 = vsel %vm814, %v807, %v524
        %v825 = vsel %vm814, %v808, %v526
        %v826 = vsel %vm814, %v809, %v528
        %v827 = vsel %vm814, %v810, %v530
        %v828 = vsel %vm814, %v811, %v532
        %v829 = vsel %vm814, %v812, %v534
        %v830 = vsel %vm814, %v813, %v536
        %vm831 = vcmask 162816
        %v832 = vsel %vm831, %v815, %v559
        %v833 = vsel %vm831, %v816, %v561
        %v834 = vsel %vm831, %v817, %v563
        %v835 = vsel %vm831, %v818, %v565
        %v836 = vsel %vm831, %v819, %v567
        %v837 = vsel %vm831, %v820, %v569
        %v838 = vsel %vm831, %v821, %v571
        %v839 = vsel %vm831, %v822, %v573
        %v840 = vsel %vm831, %v823, %v575
        %v841 = vsel %vm831, %v824, %v577
        %v842 = vsel %vm831, %v825, %v579
        %v843 = vsel %vm831, %v826, %v581
        %v844 = vsel %vm831, %v827, %v583
        %v845 = vsel %vm831, %v828, %v585
        %v846 = vsel %vm831, %v829, %v587
        %v847 = vsel %vm831, %v830, %v589
        %vm848 = vcmask 195584
        %v849 = vsel %vm848, %v832, %v609
        %v850 = vsel %vm848, %v833, %v611
        %v851 = vsel %vm848, %v834, %v613
        %v852 = vsel %vm848, %v835, %v615
        %v853 = vsel %vm848, %v836, %v617
        %v854 = vsel %vm848, %v837, %v619
        %v855 = vsel %vm848, %v838, %v621
        %v856 = vsel %vm848, %v839, %v623
        %v857 = vsel %vm848, %v840, %v625
        %v858 = vsel %vm848, %v841, %v627
        %v859 = vsel %vm848, %v842, %v629
        %v860 = vsel %vm848, %v843, %v631
        %v861 = vsel %vm848, %v844, %v633
        %v862 = vsel %vm848, %v845, %v635
        %v863 = vsel %vm848, %v846, %v637
        %v864 = vsel %vm848, %v847, %v639
        %vm865 = vcmask 228352
        %v866 = vsel %vm865, %v849, %v663
        %v867 = vsel %vm865, %v850, %v665
        %v868 = vsel %vm865, %v851, %v667
        %v869 = vsel %vm865, %v852, %v669
        %v870 = vsel %vm865, %v853, %v671
        %v871 = vsel %vm865, %v854, %v673
        %v872 = vsel %vm865, %v855, %v675
        %v873 = vsel %vm865, %v856, %v677
        %v874 = vsel %vm865, %v857, %v679
        %v875 = vsel %vm865, %v858, %v681
        %v876 = vsel %vm865, %v859, %v683
        %v877 = vsel %vm865, %v860, %v685
        %v878 = vsel %vm865, %v861, %v687
        %v879 = vsel %vm865, %v862, %v689
        %v880 = vsel %vm865, %v863, %v691
        %v881 = vsel %vm865, %v864, %v693
        %vm882 = vcmask 261120
        %v883 = vsel %vm882, %v866, %v716
        %v884 = vsel %vm882, %v867, %v718
        %v885 = vsel %vm882, %v868, %v720
        %v886 = vsel %vm882, %v869, %v722
        %v887 = vsel %vm882, %v870, %v724
        %v888 = vsel %vm882, %v871, %v726
        %v889 = vsel %vm882, %v872, %v728
        %v890 = vsel %vm882, %v873, %v730
        %v891 = vsel %vm882, %v874, %v732
        %v892 = vsel %vm882, %v875, %v734
        %v893 = vsel %vm882, %v876, %v736
        %v894 = vsel %vm882, %v877, %v738
        %v895 = vsel %vm882, %v878, %v740
        %v896 = vsel %vm882, %v879, %v742
        %v897 = vsel %vm882, %v880, %v744
        %v898 = vsel %vm882, %v881, %v746
        %v899 = vld [vmem:[%s1] sm:$0xff]
        %v900 = vld [vmem:[%s1 + $0x8] sm:$0xff]
        %v901 = vld [vmem:[%s1 + $0x10] sm:$0xff]
        %v902 = vld [vmem:[%s1 + $0x18] sm:$0xff]
        %v903 = vld [vmem:[%s1 + $0x20] sm:$0xf]
        %v904 = vld [vmem:[%s2] sm:$0x1]
        %v906 = vperm.slane %v904, 0
        %vm908 = vcmask 293888
        %v910 = vsel %vm908, %v883, 0
        %v913 = vsel %vm908, %v884, 0
        %v916 = vsel %vm908, %v885, 0
        %v919 = vsel %vm908, %v886, 0
        %v922 = vsel %vm908, %v887, 0
        %v925 = vsel %vm908, %v888, 0
        %v928 = vsel %vm908, %v889, 0
        %v931 = vsel %vm908, %v890, 0
        %v934 = vsel %vm908, %v891, 0
        %v937 = vsel %vm908, %v892, 0
        %v940 = vsel %vm908, %v893, 0
        %v943 = vsel %vm908, %v894, 0
        %v946 = vsel %vm908, %v895, 0
        %v949 = vsel %vm908, %v896, 0
        %v952 = vsel %vm908, %v897, 0
        %v955 = vsel %vm908, %v898, 0
        %vm957 = vcmask 1043456
        %v959 = vsel %vm957, %v903, 0
        %961 = vmatpush.msra.mxu0 0.0
        %962 = vmatpush.msra.mxu0 0.0
        %963 = vmatpush.msra.mxu0 0.0
        %964 = vmatpush.msra.mxu0 0.0
        %965 = vmatpush.msra.mxu0 0.0
        %966 = vmatpush.msra.mxu0 0.0
        %967 = vmatpush.msra.mxu0 0.0
        %968 = vmatpush.msra.mxu0 0.0
        %969 = vmatpush.msra.mxu0 0.0
        %970 = vmatpush.msra.mxu0 0.0
        %971 = vmatpush.msra.mxu0 0.0
        %972 = vmatpush.msra.mxu0 %v959
        %973 = vmatpush.msra.mxu0 %v902
        %974 = vmatpush.msra.mxu0 %v901
        %975 = vmatpush.msra.mxu0 %v900
        %976 = vmatpush.msra.mxu0 %v899
        %977 = vmatmul.f32.gmra.mxu0 %v910
        %v978 = vpop.f32.mrf.mxu0
        %v979 = vadd.f32 %v906, %v978
        %980 = vmatmul.f32.gmra.mxu0 %v913
        %v981 = vpop.f32.mrf.mxu0
        %v982 = vadd.f32 %v906, %v981
        %983 = vmatmul.f32.gmra.mxu0 %v916
        %v984 = vpop.f32.mrf.mxu0
        %v985 = vadd.f32 %v906, %v984
        %986 = vmatmul.f32.gmra.mxu0 %v919
        %v987 = vpop.f32.mrf.mxu0
        %v988 = vadd.f32 %v906, %v987
        %989 = vmatmul.f32.gmra.mxu0 %v922
        %v990 = vpop.f32.mrf.mxu0
        %v991 = vadd.f32 %v906, %v990
        %992 = vmatmul.f32.gmra.mxu0 %v925
        %v993 = vpop.f32.mrf.mxu0
        %v994 = vadd.f32 %v906, %v993
        %995 = vmatmul.f32.gmra.mxu0 %v928
        %v996 = vpop.f32.mrf.mxu0
        %v997 = vadd.f32 %v906, %v996
        %998 = vmatmul.f32.gmra.mxu0 %v931
        %v999 = vpop.f32.mrf.mxu0
        %v1000 = vadd.f32 %v906, %v999
        %1001 = vmatmul.f32.gmra.mxu0 %v934
        %v1002 = vpop.f32.mrf.mxu0
        %v1003 = vadd.f32 %v906, %v1002
        %1004 = vmatmul.f32.gmra.mxu0 %v937
        %v1005 = vpop.f32.mrf.mxu0
        %v1006 = vadd.f32 %v906, %v1005
        %1007 = vmatmul.f32.gmra.mxu0 %v940
        %v1008 = vpop.f32.mrf.mxu0
        %v1009 = vadd.f32 %v906, %v1008
        %1010 = vmatmul.f32.gmra.mxu0 %v943
        %v1011 = vpop.f32.mrf.mxu0
        %v1012 = vadd.f32 %v906, %v1011
        %1013 = vmatmul.f32.gmra.mxu0 %v946
        %v1014 = vpop.f32.mrf.mxu0
        %v1015 = vadd.f32 %v906, %v1014
        %1016 = vmatmul.f32.gmra.mxu0 %v949
        %v1017 = vpop.f32.mrf.mxu0
        %v1018 = vadd.f32 %v906, %v1017
        %1019 = vmatmul.f32.gmra.mxu0 %v952
        %v1020 = vpop.f32.mrf.mxu0
        %v1021 = vadd.f32 %v906, %v1020
        %1022 = vmatmul.f32.gmra.mxu0 %v955
        %v1023 = vpop.f32.mrf.mxu0
        %v1024 = vadd.f32 %v906, %v1023
        %1025 = vdwg.mxu0
        %1026 = vst [vmem:[%s177] sm:$0xff] %v979
        %1027 = vst [vmem:[%s177 + $0x8] sm:$0xff] %v982
        %1028 = vst [vmem:[%s177 + $0x10] sm:$0xff] %v985
        %1029 = vst [vmem:[%s177 + $0x18] sm:$0xff] %v988
        %1030 = vst [vmem:[%s177 + $0x20] sm:$0xff] %v991
        %1031 = vst [vmem:[%s177 + $0x28] sm:$0xff] %v994
        %1032 = vst [vmem:[%s177 + $0x30] sm:$0xff] %v997
        %1033 = vst [vmem:[%s177 + $0x38] sm:$0xff] %v1000
        %1034 = vst [vmem:[%s177 + $0x40] sm:$0xff] %v1003
        %1035 = vst [vmem:[%s177 + $0x48] sm:$0xff] %v1006
        %1036 = vst [vmem:[%s177 + $0x50] sm:$0xff] %v1009
        %1037 = vst [vmem:[%s177 + $0x58] sm:$0xff] %v1012
        %1038 = vst [vmem:[%s177 + $0x60] sm:$0xff] %v1015
        %1039 = vst [vmem:[%s177 + $0x68] sm:$0xff] %v1018
        %1040 = vst [vmem:[%s177 + $0x70] sm:$0xff] %v1021
        %1041 = vst [vmem:[%s177 + $0x78] sm:$0xff] %v1024
        %s1042 = sand.u32 %s107, 1
        %s1043 = scalar_lea.sflag [#allocation3], %s1042
        %s1044 = sand.u32 %s107, 1
        %s1045 = smul.addr %s1044, 128
        %s1046 = scalar_lea.vmem [#allocation2], %s1045
        // Predicated region
        $region33: #{tpu_custom_call.1} parent=31 // pred_check
          %p1047 = pneg %p117
        $region34: #{tpu_custom_call.1} parent=31 // pred_check_branch
          %1049 = sbr.rel (%p1047) target = $region36
        $region35: #{tpu_custom_call.1} parent=31 // pred_region
          %s1050 = smul.u32 16, %s22
          %1052 = vsyncadd %s1043, 0
          %s1053 = smul.addr %s21, 32
          %s1054 = sadd.s32 %s1050, %s1053
          %s1055 = smul.addr %s1054, 8
          %s1056 = scalar_lea.hbm %s3, %s1055
          %s1057 = sshll.u32 %s1046, 4
          %s1058 = int_to_ptr.vmem [resolvable:$true] %s1057
          %s1059 = sshll.u32 %s1056, 4
          %s1060 = int_to_ptr.hbm [resolvable:$true] %s1059
          %1065 = dma.vmem_to_hbm [thread:$0]  %s1058, 2048, %s1060, %s1043, 128, 128, 8
        $region36: #{tpu_custom_call.1} parent=31 // pred_fallthru
          _
      $region32: #{tpu_custom_call.1} parent=5 // pred_fallthru
        _
      %p1066 = scmp.le.s32.totalorder 2, %s12
      // Predicated region
      $region37: #{tpu_custom_call.1} parent=5 // pred_check
        %p1067 = pneg %p1066
      $region38: #{tpu_custom_call.1} parent=5 // pred_check_branch
        %1069 = sbr.rel (%p1067) target = $region40
      $region39: #{tpu_custom_call.1} parent=5 // pred_region
        %s1070 = ssub.s32 %s12, 2
        // Predicated region
        $region41: #{tpu_custom_call.1} parent=39 // pred_check
          %p1071 = pneg %p123
        $region42: #{tpu_custom_call.1} parent=39 // pred_check_branch
          %1073 = sbr.rel (%p1071) target = $region44
        $region43: #{tpu_custom_call.1} parent=39 // pred_region
          %s1074 = sand.u32 %s108, 1
          %s1075 = scalar_lea.sflag [#allocation3], %s1074
          %s1076 = sand.u32 %s108, 1
          %s1077 = smul.addr %s1076, 128
          %s1078 = scalar_lea.vmem [#allocation2], %s1077
          %1080 = dma.done %s1075, 2048
        $region44: #{tpu_custom_call.1} parent=39 // pred_fallthru
          _
      $region40: #{tpu_custom_call.1} parent=5 // pred_fallthru
        _
    $region6: #{tpu_custom_call.1} parent=1 // loop_footer
      %s16 = sadd.s32 1, %s12
    $region7: #{tpu_custom_call.1} parent=1 // loop_footer_branch
      %11 = sbr.rel target = $region3
    $region8: #{tpu_custom_call.1} parent=1 // loop_exit
      _
    %1081 = vsyncpa [#allocation3], 1
    %s1082 = scalar_lea.sflag [#allocation3], 1
    %1083 = vsyncpa %s1082, 1

</llo_original>
